<compile_context>
chip_gen: v7x
topology: tpu7x:2x2x1
jax: 0.10.0
libtpu: 0.0.40
codegen_flags: <defaults>
</compile_context>

<pallas_src>
import functools
import math

import jax
import jax.numpy as jnp
from jax.experimental import pallas as pl
from jax.experimental.pallas import tpu as pltpu


def _round_up(x, m):
    return ((x + m - 1) // m) * m


def make_fourier_basis(num_dims=2, num_freqs=4, dtype=jnp.float32):
    """Build F exactly like the PyTorch __init__ (used only for the reference)."""
    grids = jnp.meshgrid(*([jnp.arange(num_freqs)] * num_dims), indexing="ij")
    F = 2.0 * jnp.pi * jnp.stack(grids).reshape(num_dims, num_freqs ** num_dims)
    return F.astype(dtype)


def _fourier_kernel(x_ref, o_ref, *, num_dims, num_freqs):
    """x_ref: (D, bt)  [batch on lanes]  ->  o_ref: (2N, bt) = [sin; cos]^T."""
    D, nf = num_dims, num_freqs
    N = nf ** D
    bt = x_ref.shape[1]
    two_pi = 2.0 * math.pi

    x = x_ref[...].astype(jnp.float32)                      # (D, bt)

    # Frequency index k = 0..nf-1 on the sublane axis.
    k_grid = jax.lax.broadcasted_iota(jnp.int32, (nf, bt), 0).astype(jnp.float32)

    def dim_sincos(d):
        # phase[k, b] = 2*pi * k * x[d, b]  -- lane-dense; sublane-broadcast of x row.
        phase = two_pi * k_grid * x[d:d + 1, :]
        return jnp.sin(phase), jnp.cos(phase)               # 2*nf transcendentals / lane

    # Column ordering of F (meshgrid 'ij'): n = i_0*nf^(D-1) + ... + i_{D-1}.
    # Build sin/cos of sum_d 2*pi*i_d*x_d by angle addition, innermost dim first.
    S, C = dim_sincos(D - 1)                                 # (nf, bt)
    for d in range(D - 2, -1, -1):
        s_d, c_d = dim_sincos(d)                             # (nf, bt)
        blocks_S, blocks_C = [], []
        for k in range(nf):                                  # unrolled at trace time
            if k == 0:                                       # theta=0: sin=0, cos=1
                blocks_S.append(S)
                blocks_C.append(C)
            else:
                sk = s_d[k:k + 1, :]                         # (1, bt) sublane-broadcast
                ck = c_d[k:k + 1, :]
                blocks_S.append(sk * C + ck * S)             # sin(a+b)
                blocks_C.append(ck * C - sk * S)             # cos(a+b)
        S = jnp.concatenate(blocks_S, axis=0)                # (nf^(D-d), bt)
        C = jnp.concatenate(blocks_C, axis=0)

    # Dense, unmasked lane-wide stores (last dim = bt, a multiple of 128).
    o_ref[:N, :] = S.astype(o_ref.dtype)
    o_ref[N:, :] = C.astype(o_ref.dtype)


def _per_lane_bytes(D, nf):
    """Resident f32 bytes per batch element (lane): double-buffered x/out blocks
    plus in-kernel temporaries (per-dim sin/cos, S/C build-up, concat scratch)."""
    N = nf ** D
    return 4 * (2 * D + 2 * (2 * N) + 6 * N + 4 * D * nf)


def _pick_batch_tile(B, D, nf, *, max_tile=4096, tile_budget=20 * 2 ** 20):
    per_lane = _per_lane_bytes(D, nf)
    bt = min(max_tile, max(128, tile_budget // per_lane))
    bt = (bt // 128) * 128
    B128 = _round_up(B, 128)
    bt = min(bt, B128)
    # Keep >= 2 grid steps when the batch allows it (v7x has 2 TensorCores; the
    # extra ~0.35us step is negligible on single-TC v5e/v6e).
    if B128 >= 256:
        bt = min(bt, _round_up(-(-B128 // 2), 128))
    return max(128, bt)


def fourier_basis_forward(x, *, num_freqs=4, batch_tile=None, out_dtype=jnp.float32):
    """x: (B, num_dims) -> (B, 2*num_freqs**num_dims) == hstack(sin(x@F), cos(x@F)).

    out_dtype=jnp.bfloat16 halves output HBM traffic (useful on v5e) when the
    consumer tolerates it; compute stays f32 inside the kernel.
    """
    B, D = x.shape
    nf = int(num_freqs)
    N = nf ** D

    if batch_tile is None:
        bt = _pick_batch_tile(B, D, nf)
    else:
        bt = max(128, (int(batch_tile) // 128) * 128)

    B_pad = _round_up(B, bt)

    # Batch-on-lanes: feed x^T so the input DMA is contiguous and the MAC /
    # transcendental work is lane-dense.
    xT = x.astype(jnp.float32).T                             # (D, B)
    if B_pad != B:
        xT = jnp.pad(xT, ((0, 0), (0, B_pad - B)))

    kernel = functools.partial(_fourier_kernel, num_dims=D, num_freqs=nf)

    est_bytes = bt * _per_lane_bytes(D, nf)
    vmem_limit = min(32 * 2 ** 20, max(8 * 2 ** 20, 2 * est_bytes))

    outT = pl.pallas_call(
        kernel,
        out_shape=jax.ShapeDtypeStruct((2 * N, B_pad), out_dtype),
        grid_spec=pl.GridSpec(
            grid=(B_pad // bt,),
            in_specs=[pl.BlockSpec((D, bt), lambda i: (0, i))],
            out_specs=pl.BlockSpec((2 * N, bt), lambda i: (0, i)),
        ),
        compiler_params=pltpu.CompilerParams(
            dimension_semantics=("parallel",),
            vmem_limit_bytes=int(vmem_limit),
        ),
    )(xT)

    # Wrapper-side transpose back to (B, 2N); the slice fuses with the transpose.
    return outT[:, :B].T


def _reference(x, F):
    z = x @ F
    return jnp.hstack((jnp.sin(z), jnp.cos(z)))


if __name__ == "__main__":
    # Case 1: the module's default config (num_dims=2, num_freqs=4), small batch.
    D1, nf1, B1 = 2, 4, 8
    x1 = jax.random.uniform(jax.random.PRNGKey(0), (B1, D1), dtype=jnp.float32)
    F1 = make_fourier_basis(num_dims=D1, num_freqs=nf1)
    out1 = jax.block_until_ready(fourier_basis_forward(x1, num_freqs=nf1))
    ref1 = _reference(x1, F1)
    assert out1.shape == (B1, 2 * nf1 ** D1)
    assert jnp.allclose(out1, ref1, atol=1e-4, rtol=1e-4), "mismatch vs reference (case 1)"

    # Case 2: 3 dims, non-128-multiple batch (exercises padding + 2-step grid).
    D2, nf2, B2 = 3, 4, 300
    x2 = jax.random.uniform(jax.random.PRNGKey(1), (B2, D2), dtype=jnp.float32)
    F2 = make_fourier_basis(num_dims=D2, num_freqs=nf2)
    out2 = jax.block_until_ready(fourier_basis_forward(x2, num_freqs=nf2))
    ref2 = _reference(x2, F2)
    assert out2.shape == (B2, 2 * nf2 ** D2)
    assert jnp.allclose(out2, ref2, atol=1e-4, rtol=1e-4), "mismatch vs reference (case 2)"

    print("KERNEL_OK")
</pallas_src>

<mosaic_0001>
module attributes {stable_mosaic.version = 11 : i64} {
  func.func @_fourier_kernel(%arg0: i32, %arg1: memref<2x128xf32, #tpu.memory_space<vmem>>, %arg2: memref<32x128xf32, #tpu.memory_space<vmem>>) attributes {dimension_semantics = [#tpu.dimension_semantics<parallel>], iteration_bounds = array<i64: 1>, scalar_prefetch = 0 : i64, scratch_operands = 0 : i64, tpu.core_type = #tpu.core_type<tc>, window_params = [{transform_indices = @transform_0, window_bounds = array<i64: 2, 128>}, {transform_indices = @transform_1, window_bounds = array<i64: 32, 128>}]} {
    %c0 = arith.constant 0 : index
    %c0_0 = arith.constant 0 : index
    %0 = vector.load %arg1[%c0, %c0_0] : memref<2x128xf32, #tpu.memory_space<vmem>>, vector<2x128xf32>
    %1 = tpu.iota {dimensions = array<i32: 0>} : vector<4x128xi32>
    %2 = arith.sitofp %1 : vector<4x128xi32> to vector<4x128xf32>
    %cst = arith.constant 6.28318548 : f32
    %3 = vector.broadcast %cst : f32 to vector<4x128xf32>
    %4 = arith.mulf %3, %2 : vector<4x128xf32>
    %5 = vector.extract_strided_slice %0 {offsets = [1, 0], sizes = [1, 128], strides = [1, 1]} : vector<2x128xf32> to vector<1x128xf32>
    %6 = vector.broadcast %5 : vector<1x128xf32> to vector<4x128xf32>
    %7 = arith.mulf %4, %6 : vector<4x128xf32>
    %8 = math.sin %7 : vector<4x128xf32>
    %9 = math.cos %7 : vector<4x128xf32>
    %cst_1 = arith.constant 6.28318548 : f32
    %10 = vector.broadcast %cst_1 : f32 to vector<4x128xf32>
    %11 = arith.mulf %10, %2 : vector<4x128xf32>
    %12 = vector.extract_strided_slice %0 {offsets = [0, 0], sizes = [1, 128], strides = [1, 1]} : vector<2x128xf32> to vector<1x128xf32>
    %13 = vector.broadcast %12 : vector<1x128xf32> to vector<4x128xf32>
    %14 = arith.mulf %11, %13 : vector<4x128xf32>
    %15 = math.sin %14 : vector<4x128xf32>
    %16 = math.cos %14 : vector<4x128xf32>
    %17 = vector.extract_strided_slice %15 {offsets = [1, 0], sizes = [1, 128], strides = [1, 1]} : vector<4x128xf32> to vector<1x128xf32>
    %18 = vector.extract_strided_slice %16 {offsets = [1, 0], sizes = [1, 128], strides = [1, 1]} : vector<4x128xf32> to vector<1x128xf32>
    %19 = vector.broadcast %17 : vector<1x128xf32> to vector<4x128xf32>
    %20 = arith.mulf %19, %9 : vector<4x128xf32>
    %21 = vector.broadcast %18 : vector<1x128xf32> to vector<4x128xf32>
    %22 = arith.mulf %21, %8 : vector<4x128xf32>
    %23 = arith.addf %20, %22 : vector<4x128xf32>
    %24 = vector.broadcast %18 : vector<1x128xf32> to vector<4x128xf32>
    %25 = arith.mulf %24, %9 : vector<4x128xf32>
    %26 = vector.broadcast %17 : vector<1x128xf32> to vector<4x128xf32>
    %27 = arith.mulf %26, %8 : vector<4x128xf32>
    %28 = arith.subf %25, %27 : vector<4x128xf32>
    %29 = vector.extract_strided_slice %15 {offsets = [2, 0], sizes = [1, 128], strides = [1, 1]} : vector<4x128xf32> to vector<1x128xf32>
    %30 = vector.extract_strided_slice %16 {offsets = [2, 0], sizes = [1, 128], strides = [1, 1]} : vector<4x128xf32> to vector<1x128xf32>
    %31 = vector.broadcast %29 : vector<1x128xf32> to vector<4x128xf32>
    %32 = arith.mulf %31, %9 : vector<4x128xf32>
    %33 = vector.broadcast %30 : vector<1x128xf32> to vector<4x128xf32>
    %34 = arith.mulf %33, %8 : vector<4x128xf32>
    %35 = arith.addf %32, %34 : vector<4x128xf32>
    %36 = vector.broadcast %30 : vector<1x128xf32> to vector<4x128xf32>
    %37 = arith.mulf %36, %9 : vector<4x128xf32>
    %38 = vector.broadcast %29 : vector<1x128xf32> to vector<4x128xf32>
    %39 = arith.mulf %38, %8 : vector<4x128xf32>
    %40 = arith.subf %37, %39 : vector<4x128xf32>
    %41 = vector.extract_strided_slice %15 {offsets = [3, 0], sizes = [1, 128], strides = [1, 1]} : vector<4x128xf32> to vector<1x128xf32>
    %42 = vector.extract_strided_slice %16 {offsets = [3, 0], sizes = [1, 128], strides = [1, 1]} : vector<4x128xf32> to vector<1x128xf32>
    %43 = vector.broadcast %41 : vector<1x128xf32> to vector<4x128xf32>
    %44 = arith.mulf %43, %9 : vector<4x128xf32>
    %45 = vector.broadcast %42 : vector<1x128xf32> to vector<4x128xf32>
    %46 = arith.mulf %45, %8 : vector<4x128xf32>
    %47 = arith.addf %44, %46 : vector<4x128xf32>
    %48 = vector.broadcast %42 : vector<1x128xf32> to vector<4x128xf32>
    %49 = arith.mulf %48, %9 : vector<4x128xf32>
    %50 = vector.broadcast %41 : vector<1x128xf32> to vector<4x128xf32>
    %51 = arith.mulf %50, %8 : vector<4x128xf32>
    %52 = arith.subf %49, %51 : vector<4x128xf32>
    %53 = tpu.concatenate %8, %23, %35, %47 in 0 : vector<4x128xf32>, vector<4x128xf32>, vector<4x128xf32>, vector<4x128xf32> -> vector<16x128xf32>
    %54 = tpu.concatenate %9, %28, %40, %52 in 0 : vector<4x128xf32>, vector<4x128xf32>, vector<4x128xf32>, vector<4x128xf32> -> vector<16x128xf32>
    %c0_2 = arith.constant 0 : index
    %c0_3 = arith.constant 0 : index
    %55 = vector.load %arg2[%c0_2, %c0_3] : memref<32x128xf32, #tpu.memory_space<vmem>>, vector<16x128xf32>
    tpu.vector_store %arg2[%c0_2, %c0_3], %53 {strides = array<i32>} : memref<32x128xf32, #tpu.memory_space<vmem>>, vector<16x128xf32>,
    %c16 = arith.constant 16 : index
    %c0_4 = arith.constant 0 : index
    %56 = vector.load %arg2[%c16, %c0_4] : memref<32x128xf32, #tpu.memory_space<vmem>>, vector<16x128xf32>
    tpu.vector_store %arg2[%c16, %c0_4], %54 {strides = array<i32>} : memref<32x128xf32, #tpu.memory_space<vmem>>, vector<16x128xf32>,
    return
  }
  func.func @transform_0(%arg0: i32) -> (i32, i32) {
    %c0_i32 = arith.constant 0 : i32
    %c0_i32_0 = arith.constant 0 : i32
    return %c0_i32, %arg0 : i32, i32
  }
  func.func @transform_1(%arg0: i32) -> (i32, i32) {
    %c0_i32 = arith.constant 0 : i32
    %c0_i32_0 = arith.constant 0 : i32
    return %c0_i32, %arg0 : i32, i32
  }
}

</mosaic_0001>

<llo_original>
// kernel: tpu_custom_call.1
$region0: #{tpu_custom_call.1}
  #allocation0 [shape = 'u32[]', space=smem, size = 0x4, offset = 0x4, fixed_abs, tag = 'smem constant byte address 0x4 - core index']
  #allocation1 [shape = 'u32[144,128]{1,0:T(1,128)}', space=vmem, size = 0x12000, scoped, tag = 'internal scratch']
  %s0 = inlined_call_operand.hbm [shape: f32[2,128], index: 0, kind: input, shape index: {}]
  %s1 = inlined_call_operand.hbm [shape: f32[32,128], index: 1, kind: output, shape index: {}]
  %s2 = sld [smem:[#allocation0]]
  $region18: #{tpu_custom_call.1} parent=0
    _
  %s4 = ssub.s32 1, %s2
  %s5 = scalar_select 0, %s4, %s2
  $region1: #{tpu_custom_call.1} parent=0
    #allocation2 [shape = 'u8[1024]{0}', space=vmem, size = 0x400, scoped, tag = 'input window, operand 0, single buffered']
    #allocation3 [shape = 's32[1]{0}', space=sflag, size = 0x4, scoped, tag = 'scoped memory for tpu_custom_call.1']
    #allocation4 [shape = 's32[1]{0}', space=sflag, size = 0x4, scoped, tag = 'scoped memory for tpu_custom_call.1']
    #allocation5 [shape = 'u8[16384]{0}', space=vmem, size = 0x4000, scoped, tag = 'output window, operand 0, single buffered']
    %6 = vsyncpa [#allocation3], 0
    %7 = vsyncpa [#allocation4], 0
    // Predicated region
    $region2: #{tpu_custom_call.1} parent=1 // pred_check
      _
    $region3: #{tpu_custom_call.1} parent=1 // pred_check_branch
      %9 = sbr.rel (0) target = $region5
    $region4: #{tpu_custom_call.1} parent=1 // pred_region
      %s11 = ssub.s32 32, 32
      %12 = vsyncadd [#allocation3], %s11
      %s14 = sshll.u32 [#allocation2], 4
      %s15 = int_to_ptr.vmem [resolvable:$true] %s14
      %17 = dma.hbm_to_vmem [thread:$0]  %s0, 32, %s15, [#allocation3]
    $region5: #{tpu_custom_call.1} parent=1 // pred_fallthru
      _
    // Predicated region
    $region6: #{tpu_custom_call.1} parent=1 // pred_check
      _
    $region7: #{tpu_custom_call.1} parent=1 // pred_check_branch
      %19 = sbr.rel (0) target = $region9
    $region8: #{tpu_custom_call.1} parent=1 // pred_region
      %20 = dma.done [#allocation3], 32
    $region9: #{tpu_custom_call.1} parent=1 // pred_fallthru
      _
    %v21 = vld [vmem:[#allocation2] sm:$0x3]
    %v22 = vlaneseq
    %v23 = vshrl.u32 %v22, 7
    %v24 = vcvt.s32.f32 %v23
    %v25 = vmul.f32 %v24, 6.2831855
    %v26 = vlaneseq
    %v27 = vshrl.u32 %v26, 7
    %v28 = vsub.s32 1, %v27
    %v29 = vrot.slane %v21, %v28
    %v30 = vmul.f32 %v25, %v29
    %v31 = vand.u32 2147483647, %v30
    %vm32 = vcmp.le.f32.partialorder %v31, 0.7853982
    %vm33 = vcmp.lt.s32.totalorder %v30, 0
    %v34 = vand.u32 %v30, 2139095040
    %v35 = vshrl.u32 %v34, 23
    %v36 = vsub.s32 %v35, 127
    %v37 = vand.u32 2147483647, %v30
    %v38 = vand.u32 %v37, 8388607
    %v39 = vor.u32 %v38, 8388608
    %v40 = vsub.s32 0, %v39
    %v41 = vadd.s32 %v36, 1
    %vm42 = vcmp.gt.s32.totalorder %v41, 0
    %v43 = vsel %vm42, %v41, 0
    %v44 = vshrl.u32 %v43, 5
    %v45 = vand.u32 %v43, 31
    %v46 = vsub.s32 32, %v45
    %v47 = vshrl.u32 683565275, %v46
    %v48 = vshll.u32 683565275, %v45
    %v49 = vshrl.u32 2475754826, %v46
    %v50 = vor.u32 %v48, %v49
    %v51 = vshll.u32 2475754826, %v45
    %v52 = vshrl.u32 2131351028, %v46
    %v53 = vor.u32 %v51, %v52
    %v54 = vshll.u32 2131351028, %v45
    %v55 = vshrl.u32 2102212464, %v46
    %v56 = vor.u32 %v54, %v55
    %v57 = vshll.u32 2102212464, %v45
    %v58 = vshrl.u32 920167782, %v46
    %v59 = vor.u32 %v57, %v58
    %v60 = vshll.u32 920167782, %v45
    %v61 = vshrl.u32 1326507024, %v46
    %v62 = vor.u32 %v60, %v61
    %vm63 = vcmp.lt.s32.totalorder %v44, 1
    %vm64 = vcmp.lt.s32.totalorder %v44, 2
    %vm65 = vcmp.lt.s32.totalorder %v44, 3
    %vm66 = vcmp.lt.s32.totalorder %v44, 4
    %v67 = vsel %vm63, %v47, %v50
    %v68 = vsel %vm66, %v56, 2102212464
    %v69 = vsel %vm65, %v53, %v68
    %v70 = vsel %vm64, %v67, %v69
    %v71 = vsel %vm63, %v50, %v53
    %v72 = vsel %vm66, %v59, 920167782
    %v73 = vsel %vm65, %v56, %v72
    %v74 = vsel %vm64, %v71, %v73
    %v75 = vsel %vm63, %v53, %v56
    %v76 = vsel %vm66, %v62, 1326507024
    %v77 = vsel %vm65, %v59, %v76
    %v78 = vsel %vm64, %v75, %v77
    %v79 = vshll.u32 %v39, 8
    %v80 = vmul.u32.u64.compose %v79, %v78
    %v81 = vextract.low.u32 %v80
    %v82 = vextract.high.u32 %v80
    %v83 = vmul.u32.u64.compose %v79, %v74
    %v84 = vextract.low.u32 %v83
    %v85 = vextract.high.u32 %v83
    %v86 = vmul.u32 %v79, %v70
    %v87 = vadd.s32 %v82, %v84
    %vm88 = vc.u32 %v82, %v84
    %v89 = vadd.s32 %v85, 1
    %v90 = vsel %vm88, %v89, %v85
    %v91 = vadd.s32 %v86, %v90
    %v92 = vadd.s32 %v91, 536870912
    %v93 = vshrl.u32 %v92, 30
    %v94 = vshll.u32 %v93, 30
    %v95 = vsub.s32 %v91, %v94
    %vm96 = vcmp.lt.s32.totalorder %v95, 0
    %v97 = vsub.s32 0, %v95
    %v98 = vsel %vm96, %v97, %v95
    %v99 = vclz %v98
    %v100 = vsub.s32 %v99, 2
    %vm101 = vcmp.gt.s32.totalorder 0, %v100
    %v102 = vsel %vm101, 0, %v100
    %v103 = vsub.s32 32, %v102
    %v104 = vshll.u32 %v95, %v102
    %v105 = vshrl.u32 %v87, %v103
    %v106 = vor.u32 %v104, %v105
    %v107 = vsub.s32 4294967266, %v102
    %v108 = vadd.s32 %v107, 127
    %v109 = vshll.u32 %v108, 23
    %v110 = vor.u32 4788187, %v109
    %v111 = vand.u32 2147483647, %v110
    %v113 = vcvt.s32.f32 %v106
    %v114 = vmul.f32 %v113, %v111
    %v115 = vxor.u32 %v114, 2147483648
    %v116 = vsel %vm33, %v115, %v114
    %v117 = vsub.s32 4, %v93
    %v118 = vsel %vm33, %v117, %v93
    %v119 = vsel %vm32, %v30, %v116
    %v120 = vsel %vm32, 0, %v118
    %v121 = vcosq.f32.pop %v119
    %v122 = vsinq.f32.pop %v119
    %vm123 = vweird.f32 %v30
    %v124 = vadd.s32 %v120, 3
    %v125 = vand.u32 %v124, 3
    %vm126 = vcmp.lt.s32.totalorder %v125, 2
    %vm127 = vcmp.eq.s32.totalorder %v125, 0
    %v128 = vxor.u32 %v122, 2147483648
    %v129 = vsel %vm127, %v121, %v128
    %vm130 = vcmp.eq.s32.totalorder %v125, 2
    %v131 = vxor.u32 %v121, 2147483648
    %v132 = vsel %vm130, %v131, %v122
    %v133 = vsel %vm126, %v129, %v132
    %v134 = vsel %vm123, nan, %v133
    %v135 = vand.u32 2147483647, %v30
    %vm136 = vcmp.le.f32.partialorder %v135, 0.7853982
    %vm137 = vcmp.lt.s32.totalorder %v30, 0
    %v138 = vand.u32 %v30, 2139095040
    %v139 = vshrl.u32 %v138, 23
    %v140 = vsub.s32 %v139, 127
    %v141 = vand.u32 2147483647, %v30
    %v142 = vand.u32 %v141, 8388607
    %v143 = vor.u32 %v142, 8388608
    %v144 = vsub.s32 0, %v143
    %v145 = vadd.s32 %v140, 1
    %vm146 = vcmp.gt.s32.totalorder %v145, 0
    %v147 = vsel %vm146, %v145, 0
    %v148 = vshrl.u32 %v147, 5
    %v149 = vand.u32 %v147, 31
    %v150 = vsub.s32 32, %v149
    %v151 = vshrl.u32 683565275, %v150
    %v152 = vshll.u32 683565275, %v149
    %v153 = vshrl.u32 2475754826, %v150
    %v154 = vor.u32 %v152, %v153
    %v155 = vshll.u32 2475754826, %v149
    %v156 = vshrl.u32 2131351028, %v150
    %v157 = vor.u32 %v155, %v156
    %v158 = vshll.u32 2131351028, %v149
    %v159 = vshrl.u32 2102212464, %v150
    %v160 = vor.u32 %v158, %v159
    %v161 = vshll.u32 2102212464, %v149
    %v162 = vshrl.u32 920167782, %v150
    %v163 = vor.u32 %v161, %v162
    %v164 = vshll.u32 920167782, %v149
    %v165 = vshrl.u32 1326507024, %v150
    %v166 = vor.u32 %v164, %v165
    %vm167 = vcmp.lt.s32.totalorder %v148, 1
    %vm168 = vcmp.lt.s32.totalorder %v148, 2
    %vm169 = vcmp.lt.s32.totalorder %v148, 3
    %vm170 = vcmp.lt.s32.totalorder %v148, 4
    %v171 = vsel %vm167, %v151, %v154
    %v172 = vsel %vm170, %v160, 2102212464
    %v173 = vsel %vm169, %v157, %v172
    %v174 = vsel %vm168, %v171, %v173
    %v175 = vsel %vm167, %v154, %v157
    %v176 = vsel %vm170, %v163, 920167782
    %v177 = vsel %vm169, %v160, %v176
    %v178 = vsel %vm168, %v175, %v177
    %v179 = vsel %vm167, %v157, %v160
    %v180 = vsel %vm170, %v166, 1326507024
    %v181 = vsel %vm169, %v163, %v180
    %v182 = vsel %vm168, %v179, %v181
    %v183 = vshll.u32 %v143, 8
    %v184 = vmul.u32.u64.compose %v183, %v182
    %v185 = vextract.low.u32 %v184
    %v186 = vextract.high.u32 %v184
    %v187 = vmul.u32.u64.compose %v183, %v178
    %v188 = vextract.low.u32 %v187
    %v189 = vextract.high.u32 %v187
    %v190 = vmul.u32 %v183, %v174
    %v191 = vadd.s32 %v186, %v188
    %vm192 = vc.u32 %v186, %v188
    %v193 = vadd.s32 %v189, 1
    %v194 = vsel %vm192, %v193, %v189
    %v195 = vadd.s32 %v190, %v194
    %v196 = vadd.s32 %v195, 536870912
    %v197 = vshrl.u32 %v196, 30
    %v198 = vshll.u32 %v197, 30
    %v199 = vsub.s32 %v195, %v198
    %vm200 = vcmp.lt.s32.totalorder %v199, 0
    %v201 = vsub.s32 0, %v199
    %v202 = vsel %vm200, %v201, %v199
    %v203 = vclz %v202
    %v204 = vsub.s32 %v203, 2
    %vm205 = vcmp.gt.s32.totalorder 0, %v204
    %v206 = vsel %vm205, 0, %v204
    %v207 = vsub.s32 32, %v206
    %v208 = vshll.u32 %v199, %v206
    %v209 = vshrl.u32 %v191, %v207
    %v210 = vor.u32 %v208, %v209
    %v211 = vsub.s32 4294967266, %v206
    %v212 = vadd.s32 %v211, 127
    %v213 = vshll.u32 %v212, 23
    %v214 = vor.u32 4788187, %v213
    %v215 = vand.u32 2147483647, %v214
    %v217 = vcvt.s32.f32 %v210
    %v218 = vmul.f32 %v217, %v215
    %v219 = vxor.u32 %v218, 2147483648
    %v220 = vsel %vm137, %v219, %v218
    %v221 = vsub.s32 4, %v197
    %v222 = vsel %vm137, %v221, %v197
    %v223 = vsel %vm136, %v30, %v220
    %v224 = vsel %vm136, 0, %v222
    %v225 = vcosq.f32.pop %v223
    %v226 = vsinq.f32.pop %v223
    %vm227 = vweird.f32 %v30
    %v228 = vand.u32 %v224, 3
    %vm229 = vcmp.lt.s32.totalorder %v228, 2
    %vm230 = vcmp.eq.s32.totalorder %v228, 0
    %v231 = vxor.u32 %v226, 2147483648
    %v232 = vsel %vm230, %v225, %v231
    %vm233 = vcmp.eq.s32.totalorder %v228, 2
    %v234 = vxor.u32 %v225, 2147483648
    %v235 = vsel %vm233, %v234, %v226
    %v236 = vsel %vm229, %v232, %v235
    %v237 = vsel %vm227, nan, %v236
    %v238 = vlaneseq
    %v239 = vshrl.u32 %v238, 7
    %v240 = vsub.s32 0, %v239
    %v241 = vrot.slane %v21, %v240
    %v242 = vmul.f32 %v25, %v241
    %v243 = vand.u32 2147483647, %v242
    %vm244 = vcmp.le.f32.partialorder %v243, 0.7853982
    %vm245 = vcmp.lt.s32.totalorder %v242, 0
    %v246 = vand.u32 %v242, 2139095040
    %v247 = vshrl.u32 %v246, 23
    %v248 = vsub.s32 %v247, 127
    %v249 = vand.u32 2147483647, %v242
    %v250 = vand.u32 %v249, 8388607
    %v251 = vor.u32 %v250, 8388608
    %v252 = vsub.s32 0, %v251
    %v253 = vadd.s32 %v248, 1
    %vm254 = vcmp.gt.s32.totalorder %v253, 0
    %v255 = vsel %vm254, %v253, 0
    %v256 = vshrl.u32 %v255, 5
    %v257 = vand.u32 %v255, 31
    %v258 = vsub.s32 32, %v257
    %v259 = vshrl.u32 683565275, %v258
    %v260 = vshll.u32 683565275, %v257
    %v261 = vshrl.u32 2475754826, %v258
    %v262 = vor.u32 %v260, %v261
    %v263 = vshll.u32 2475754826, %v257
    %v264 = vshrl.u32 2131351028, %v258
    %v265 = vor.u32 %v263, %v264
    %v266 = vshll.u32 2131351028, %v257
    %v267 = vshrl.u32 2102212464, %v258
    %v268 = vor.u32 %v266, %v267
    %v269 = vshll.u32 2102212464, %v257
    %v270 = vshrl.u32 920167782, %v258
    %v271 = vor.u32 %v269, %v270
    %v272 = vshll.u32 920167782, %v257
    %v273 = vshrl.u32 1326507024, %v258
    %v274 = vor.u32 %v272, %v273
    %vm275 = vcmp.lt.s32.totalorder %v256, 1
    %vm276 = vcmp.lt.s32.totalorder %v256, 2
    %vm277 = vcmp.lt.s32.totalorder %v256, 3
    %vm278 = vcmp.lt.s32.totalorder %v256, 4
    %v279 = vsel %vm275, %v259, %v262
    %v280 = vsel %vm278, %v268, 2102212464
    %v281 = vsel %vm277, %v265, %v280
    %v282 = vsel %vm276, %v279, %v281
    %v283 = vsel %vm275, %v262, %v265
    %v284 = vsel %vm278, %v271, 920167782
    %v285 = vsel %vm277, %v268, %v284
    %v286 = vsel %vm276, %v283, %v285
    %v287 = vsel %vm275, %v265, %v268
    %v288 = vsel %vm278, %v274, 1326507024
    %v289 = vsel %vm277, %v271, %v288
    %v290 = vsel %vm276, %v287, %v289
    %v291 = vshll.u32 %v251, 8
    %v292 = vmul.u32.u64.compose %v291, %v290
    %v293 = vextract.low.u32 %v292
    %v294 = vextract.high.u32 %v292
    %v295 = vmul.u32.u64.compose %v291, %v286
    %v296 = vextract.low.u32 %v295
    %v297 = vextract.high.u32 %v295
    %v298 = vmul.u32 %v291, %v282
    %v299 = vadd.s32 %v294, %v296
    %vm300 = vc.u32 %v294, %v296
    %v301 = vadd.s32 %v297, 1
    %v302 = vsel %vm300, %v301, %v297
    %v303 = vadd.s32 %v298, %v302
    %v304 = vadd.s32 %v303, 536870912
    %v305 = vshrl.u32 %v304, 30
    %v306 = vshll.u32 %v305, 30
    %v307 = vsub.s32 %v303, %v306
    %vm308 = vcmp.lt.s32.totalorder %v307, 0
    %v309 = vsub.s32 0, %v307
    %v310 = vsel %vm308, %v309, %v307
    %v311 = vclz %v310
    %v312 = vsub.s32 %v311, 2
    %vm313 = vcmp.gt.s32.totalorder 0, %v312
    %v314 = vsel %vm313, 0, %v312
    %v315 = vsub.s32 32, %v314
    %v316 = vshll.u32 %v307, %v314
    %v317 = vshrl.u32 %v299, %v315
    %v318 = vor.u32 %v316, %v317
    %v319 = vsub.s32 4294967266, %v314
    %v320 = vadd.s32 %v319, 127
    %v321 = vshll.u32 %v320, 23
    %v322 = vor.u32 4788187, %v321
    %v323 = vand.u32 2147483647, %v322
    %v325 = vcvt.s32.f32 %v318
    %v326 = vmul.f32 %v325, %v323
    %v327 = vxor.u32 %v326, 2147483648
    %v328 = vsel %vm245, %v327, %v326
    %v329 = vsub.s32 4, %v305
    %v330 = vsel %vm245, %v329, %v305
    %v331 = vsel %vm244, %v242, %v328
    %v332 = vsel %vm244, 0, %v330
    %v333 = vcosq.f32.pop %v331
    %v334 = vsinq.f32.pop %v331
    %vm335 = vweird.f32 %v242
    %v336 = vadd.s32 %v332, 3
    %v337 = vand.u32 %v336, 3
    %vm338 = vcmp.lt.s32.totalorder %v337, 2
    %vm339 = vcmp.eq.s32.totalorder %v337, 0
    %v340 = vxor.u32 %v334, 2147483648
    %v341 = vsel %vm339, %v333, %v340
    %vm342 = vcmp.eq.s32.totalorder %v337, 2
    %v343 = vxor.u32 %v333, 2147483648
    %v344 = vsel %vm342, %v343, %v334
    %v345 = vsel %vm338, %v341, %v344
    %v346 = vsel %vm335, nan, %v345
    %v347 = vand.u32 2147483647, %v242
    %vm348 = vcmp.le.f32.partialorder %v347, 0.7853982
    %vm349 = vcmp.lt.s32.totalorder %v242, 0
    %v350 = vand.u32 %v242, 2139095040
    %v351 = vshrl.u32 %v350, 23
    %v352 = vsub.s32 %v351, 127
    %v353 = vand.u32 2147483647, %v242
    %v354 = vand.u32 %v353, 8388607
    %v355 = vor.u32 %v354, 8388608
    %v356 = vsub.s32 0, %v355
    %v357 = vadd.s32 %v352, 1
    %vm358 = vcmp.gt.s32.totalorder %v357, 0
    %v359 = vsel %vm358, %v357, 0
    %v360 = vshrl.u32 %v359, 5
    %v361 = vand.u32 %v359, 31
    %v362 = vsub.s32 32, %v361
    %v363 = vshrl.u32 683565275, %v362
    %v364 = vshll.u32 683565275, %v361
    %v365 = vshrl.u32 2475754826, %v362
    %v366 = vor.u32 %v364, %v365
    %v367 = vshll.u32 2475754826, %v361
    %v368 = vshrl.u32 2131351028, %v362
    %v369 = vor.u32 %v367, %v368
    %v370 = vshll.u32 2131351028, %v361
    %v371 = vshrl.u32 2102212464, %v362
    %v372 = vor.u32 %v370, %v371
    %v373 = vshll.u32 2102212464, %v361
    %v374 = vshrl.u32 920167782, %v362
    %v375 = vor.u32 %v373, %v374
    %v376 = vshll.u32 920167782, %v361
    %v377 = vshrl.u32 1326507024, %v362
    %v378 = vor.u32 %v376, %v377
    %vm379 = vcmp.lt.s32.totalorder %v360, 1
    %vm380 = vcmp.lt.s32.totalorder %v360, 2
    %vm381 = vcmp.lt.s32.totalorder %v360, 3
    %vm382 = vcmp.lt.s32.totalorder %v360, 4
    %v383 = vsel %vm379, %v363, %v366
    %v384 = vsel %vm382, %v372, 2102212464
    %v385 = vsel %vm381, %v369, %v384
    %v386 = vsel %vm380, %v383, %v385
    %v387 = vsel %vm379, %v366, %v369
    %v388 = vsel %vm382, %v375, 920167782
    %v389 = vsel %vm381, %v372, %v388
    %v390 = vsel %vm380, %v387, %v389
    %v391 = vsel %vm379, %v369, %v372
    %v392 = vsel %vm382, %v378, 1326507024
    %v393 = vsel %vm381, %v375, %v392
    %v394 = vsel %vm380, %v391, %v393
    %v395 = vshll.u32 %v355, 8
    %v396 = vmul.u32.u64.compose %v395, %v394
    %v397 = vextract.low.u32 %v396
    %v398 = vextract.high.u32 %v396
    %v399 = vmul.u32.u64.compose %v395, %v390
    %v400 = vextract.low.u32 %v399
    %v401 = vextract.high.u32 %v399
    %v402 = vmul.u32 %v395, %v386
    %v403 = vadd.s32 %v398, %v400
    %vm404 = vc.u32 %v398, %v400
    %v405 = vadd.s32 %v401, 1
    %v406 = vsel %vm404, %v405, %v401
    %v407 = vadd.s32 %v402, %v406
    %v408 = vadd.s32 %v407, 536870912
    %v409 = vshrl.u32 %v408, 30
    %v410 = vshll.u32 %v409, 30
    %v411 = vsub.s32 %v407, %v410
    %vm412 = vcmp.lt.s32.totalorder %v411, 0
    %v413 = vsub.s32 0, %v411
    %v414 = vsel %vm412, %v413, %v411
    %v415 = vclz %v414
    %v416 = vsub.s32 %v415, 2
    %vm417 = vcmp.gt.s32.totalorder 0, %v416
    %v418 = vsel %vm417, 0, %v416
    %v419 = vsub.s32 32, %v418
    %v420 = vshll.u32 %v411, %v418
    %v421 = vshrl.u32 %v403, %v419
    %v422 = vor.u32 %v420, %v421
    %v423 = vsub.s32 4294967266, %v418
    %v424 = vadd.s32 %v423, 127
    %v425 = vshll.u32 %v424, 23
    %v426 = vor.u32 4788187, %v425
    %v427 = vand.u32 2147483647, %v426
    %v429 = vcvt.s32.f32 %v422
    %v430 = vmul.f32 %v429, %v427
    %v431 = vxor.u32 %v430, 2147483648
    %v432 = vsel %vm349, %v431, %v430
    %v433 = vsub.s32 4, %v409
    %v434 = vsel %vm349, %v433, %v409
    %v435 = vsel %vm348, %v242, %v432
    %v436 = vsel %vm348, 0, %v434
    %v437 = vcosq.f32.pop %v435
    %v438 = vsinq.f32.pop %v435
    %vm439 = vweird.f32 %v242
    %v440 = vand.u32 %v436, 3
    %vm441 = vcmp.lt.s32.totalorder %v440, 2
    %vm442 = vcmp.eq.s32.totalorder %v440, 0
    %v443 = vxor.u32 %v438, 2147483648
    %v444 = vsel %vm442, %v437, %v443
    %vm445 = vcmp.eq.s32.totalorder %v440, 2
    %v446 = vxor.u32 %v437, 2147483648
    %v447 = vsel %vm445, %v446, %v438
    %v448 = vsel %vm441, %v444, %v447
    %v449 = vsel %vm439, nan, %v448
    %v450 = vlaneseq
    %v451 = vshrl.u32 %v450, 7
    %v452 = vsub.s32 1, %v451
    %v453 = vrot.slane %v346, %v452
    %v454 = vmul.f32 %v453, %v237
    %v455 = vlaneseq
    %v456 = vshrl.u32 %v455, 7
    %v457 = vsub.s32 1, %v456
    %v458 = vrot.slane %v449, %v457
    %v459 = vmul.f32 %v458, %v134
    %v460 = vadd.f32 %v454, %v459
    %v461 = vmul.f32 %v458, %v237
    %v462 = vmul.f32 %v453, %v134
    %v463 = vsub.f32 %v461, %v462
    %v464 = vlaneseq
    %v465 = vshrl.u32 %v464, 7
    %v466 = vsub.s32 2, %v465
    %v467 = vrot.slane %v346, %v466
    %v468 = vmul.f32 %v467, %v237
    %v469 = vlaneseq
    %v470 = vshrl.u32 %v469, 7
    %v471 = vsub.s32 2, %v470
    %v472 = vrot.slane %v449, %v471
    %v473 = vmul.f32 %v472, %v134
    %v474 = vadd.f32 %v468, %v473
    %v475 = vmul.f32 %v472, %v237
    %v476 = vmul.f32 %v467, %v134
    %v477 = vsub.f32 %v475, %v476
    %v478 = vlaneseq
    %v479 = vshrl.u32 %v478, 7
    %v480 = vsub.s32 3, %v479
    %v481 = vrot.slane %v346, %v480
    %v482 = vmul.f32 %v481, %v237
    %v483 = vlaneseq
    %v484 = vshrl.u32 %v483, 7
    %v485 = vsub.s32 3, %v484
    %v486 = vrot.slane %v449, %v485
    %v487 = vmul.f32 %v486, %v134
    %v488 = vadd.f32 %v482, %v487
    %v489 = vmul.f32 %v486, %v237
    %v490 = vmul.f32 %v481, %v134
    %v491 = vsub.f32 %v489, %v490
    %v493 = vrot.slane %v460, 4
    %v496 = vrot.slane %v488, 4
    %vm498 = vcmask 1043456
    %v499 = vsel %vm498, %v134, %v493
    %v500 = vsel %vm498, %v474, %v496
    %v502 = vrot.slane %v463, 4
    %v505 = vrot.slane %v491, 4
    %v507 = vsel %vm498, %v237, %v502
    %v508 = vsel %vm498, %v477, %v505
    %509 = vst [vmem:[#allocation5] sm:$0xff] %v499
    %510 = vst [vmem:[#allocation5 + $0x8] sm:$0xff] %v500
    %511 = vst [vmem:[#allocation5 + $0x10] sm:$0xff] %v507
    %512 = vst [vmem:[#allocation5 + $0x18] sm:$0xff] %v508
    // Predicated region
    $region10: #{tpu_custom_call.1} parent=1 // pred_check
      _
    $region11: #{tpu_custom_call.1} parent=1 // pred_check_branch
      %514 = sbr.rel (0) target = $region13
    $region12: #{tpu_custom_call.1} parent=1 // pred_region
      %s516 = ssub.s32 512, 512
      %517 = vsyncadd [#allocation4], %s516
      %s518 = sshll.u32 [#allocation5], 4
      %s519 = int_to_ptr.vmem [resolvable:$true] %s518
      %524 = dma.vmem_to_hbm [thread:$0]  %s519, 512, %s1, [#allocation4], 128, 128, 8
    $region13: #{tpu_custom_call.1} parent=1 // pred_fallthru
      _
    // Predicated region
    $region14: #{tpu_custom_call.1} parent=1 // pred_check
      _
    $region15: #{tpu_custom_call.1} parent=1 // pred_check_branch
      %526 = sbr.rel (0) target = $region17
    $region16: #{tpu_custom_call.1} parent=1 // pred_region
      %527 = dma.done [#allocation4], 512
    $region17: #{tpu_custom_call.1} parent=1 // pred_fallthru
      _
    %528 = vsyncpa [#allocation3], 1
    %529 = vsyncpa [#allocation4], 1

</llo_original>
